<compile_context>
chip_gen: v6e
topology: v6e:2x2x1
jax: 0.10.0
libtpu: 0.0.40
codegen_flags: <defaults>
</compile_context>

<pallas_src>
import functools
import math

import jax
import jax.numpy as jnp
import numpy as np
from jax import lax
from jax.experimental import pallas as pl
from jax.experimental.pallas import tpu as pltpu


def _segrnn_kernel(mxu_dtype,
                   xw_ref, dec_ref, sl_ref,
                   wp_ref, bp_ref,
                   wi_ref, wh_ref, bi3_ref, bhn_ref,
                   wre_ref, bre_ref,
                   out_ref, gi_ref):
    f32 = jnp.float32
    N, T, W = xw_ref.shape            # patches, BC-row tile, patch_len
    M = dec_ref.shape[0]              # decoder positions
    d = wh_ref.shape[0]               # hidden size

    wp = wp_ref[...].astype(mxu_dtype)
    bp = bp_ref[...]
    wi = wi_ref[...].astype(mxu_dtype)     # [d, 3d] = [Wir | Wiz | Win]
    wh = wh_ref[...].astype(mxu_dtype)     # [d, 3d] = [Whr | Whz | Whn]
    bi3 = bi3_ref[...]                     # [1, 3d] = [bir+bhr | biz+bhz | bin]
    bhn = bhn_ref[...]                     # [1, d]   (kept separate: r*(h@Whn + bhn))
    wre = wre_ref[...].astype(mxu_dtype)
    bre = bre_ref[...]

    def sigmoid(v):                        # single EUP tanh per gate
        return 0.5 * (jnp.tanh(0.5 * v) + 1.0)

    def gru_gates(gi, gh, h):
        # PyTorch GRU semantics with pre-computed gate pre-activations.
        r = sigmoid(gi[..., :d] + gh[..., :d])
        z = sigmoid(gi[..., d:2 * d] + gh[..., d:2 * d])
        n = jnp.tanh(gi[..., 2 * d:] + r * (gh[..., 2 * d:] + bhn))
        return (1.0 - z) * n + z * h

    # ---- hoisted input path: patch linear + input-side gate matmuls for all N steps ----
    x_all = xw_ref[...].reshape(N * T, W).astype(mxu_dtype)
    enc = jnp.maximum(jnp.dot(x_all, wp, preferred_element_type=f32) + bp, 0.0)
    gi_enc = jnp.dot(enc.astype(mxu_dtype), wi, preferred_element_type=f32) + bi3
    gi_ref[...] = gi_enc.reshape(N, T, 3 * d)

    # ---- encoder recurrence: per step only h@Wh + elementwise gates ----
    def enc_step(t, h):
        gh = jnp.dot(h.astype(mxu_dtype), wh, preferred_element_type=f32)
        return gru_gates(gi_ref[t], gh, h)

    h = lax.fori_loop(0, N, enc_step, jnp.zeros((T, d), f32), unroll=True)

    # ---- decoder: h-side contribution computed once, broadcast over M positions ----
    gh_dec = jnp.dot(h.astype(mxu_dtype), wh, preferred_element_type=f32)        # [T, 3d]
    gi_dec = (jnp.dot(dec_ref[...].reshape(M * T, d).astype(mxu_dtype), wi,
                      preferred_element_type=f32) + bi3).reshape(M, T, 3 * d)
    h_dec = gru_gates(gi_dec, gh_dec[None], h[None])                             # [M, T, d]
    # Dropout is the identity at inference time.

    # ---- output projection: build one lane-dense [T, M*W] slab, single store ----
    cols = [jnp.dot(h_dec[m].astype(mxu_dtype), wre,
                    preferred_element_type=f32) + bre for m in range(M)]
    yw = jnp.concatenate(cols, axis=-1)                                          # [T, M*W]
    out_ref[...] = yw + sl_ref[...]                                              # residual seq_last


def _pick_row_tile(bc, n, m, w, d, budget_bytes):
    """Largest BC-row tile (multiple of 8 dividing BC) that fits the VMEM budget.

    budget_bytes should be ~half on v7x (64 MiB physical VMEM) vs v5e/v6e (128 MiB).
    """
    per_row = 4 * (2 * (n * w + m * d + m * w) + n * 3 * d + 4 * d)  # f32, dbl-buffered blocks + scratch
    cap = max(8, budget_bytes // max(per_row, 1))
    for t in (1024, 512, 256, 128, 64, 32, 16, 8):
        if t <= cap and bc % t == 0:
            return t
    return bc  # tiny BC: single block equal to the full dim (always legal)


def segrnn_forward(x, params, *, seq_len, pred_len, patch_len, d_model,
                   mxu_dtype=jnp.float32, vmem_budget_bytes=8 << 20):
    B, L, C = x.shape
    assert L == seq_len
    N = seq_len // patch_len
    M = pred_len // patch_len
    W = patch_len
    d = d_model
    d2 = d // 2
    BC = B * C

    x = x.astype(jnp.float32)
    seq_last = x[:, -1, :]                                           # [B, C]
    xc = jnp.transpose(x, (0, 2, 1)) - seq_last[:, :, None]          # [B, C, L] centered
    xw3 = xc.reshape(BC, N, W).transpose(1, 0, 2)                    # [N, BC, W]
    sl2 = seq_last.reshape(BC, 1)                                    # [BC, 1]

    # Decoder inputs, m-major: dec3[m, b*C+c] = [pos_emb[m] | channel_emb[c]]
    pos = jnp.broadcast_to(params["pos_emb"][:, None, :], (M, BC, d2))
    chan = jnp.broadcast_to(params["channel_emb"][None, None, :, :],
                            (M, B, C, d2)).reshape(M, BC, d2)
    dec3 = jnp.concatenate([pos, chan], axis=-1)                     # [M, BC, d]

    # Fused gate weights / biases (exact algebra).
    wi = jnp.concatenate([params["wir"], params["wiz"], params["win"]], axis=1)  # [d, 3d]
    wh = jnp.concatenate([params["whr"], params["whz"], params["whn"]], axis=1)  # [d, 3d]
    bi3 = jnp.concatenate([params["bir"] + params["bhr"],
                           params["biz"] + params["bhz"],
                           params["bin"]], axis=1)                               # [1, 3d]
    bhn = params["bhn"]                                                          # [1, d]

    TBC = _pick_row_tile(BC, N, M, W, d, vmem_budget_bytes)
    grid = (BC // TBC,)

    in_specs = [
        pl.BlockSpec((N, TBC, W), lambda i: (0, i, 0)),      # xw3 (row-tiled)
        pl.BlockSpec((M, TBC, d), lambda i: (0, i, 0)),      # dec3 (row-tiled)
        pl.BlockSpec((TBC, 1), lambda i: (i, 0)),            # seq_last (row-tiled)
        pl.BlockSpec((W, d), lambda i: (0, 0)),              # wp     (VMEM-resident)
        pl.BlockSpec((1, d), lambda i: (0, 0)),              # bp
        pl.BlockSpec((d, 3 * d), lambda i: (0, 0)),          # Wi fused
        pl.BlockSpec((d, 3 * d), lambda i: (0, 0)),          # Wh fused
        pl.BlockSpec((1, 3 * d), lambda i: (0, 0)),          # fused input-side biases
        pl.BlockSpec((1, d), lambda i: (0, 0)),              # bhn
        pl.BlockSpec((d, W), lambda i: (0, 0)),              # wre
        pl.BlockSpec((1, W), lambda i: (0, 0)),              # bre
    ]
    out_spec = pl.BlockSpec((TBC, M * W), lambda i: (i, 0))  # lane-dense pred_len slab

    out = pl.pallas_call(
        functools.partial(_segrnn_kernel, mxu_dtype),
        out_shape=jax.ShapeDtypeStruct((BC, M * W), jnp.float32),
        grid_spec=pltpu.PrefetchScalarGridSpec(
            num_scalar_prefetch=0,
            grid=grid,
            in_specs=in_specs,
            out_specs=out_spec,
            scratch_shapes=[pltpu.VMEM((N, TBC, 3 * d), jnp.float32)],
        ),
        compiler_params=pltpu.CompilerParams(
            dimension_semantics=("parallel",),        # BC tiles independent -> 2 TCs on v7x
            vmem_limit_bytes=32 * 1024 * 1024,
        ),
    )(xw3, dec3, sl2, params["wp"], params["bp"], wi, wh, bi3, bhn,
      params["wre"], params["bre"])

    # out[b*C+c, m*W+w] -> y[b, m*W+w, c]
    y = out.reshape(B, C, M * W).transpose(0, 2, 1)
    return y


def segrnn_reference(x, params, *, seq_len, pred_len, patch_len, d_model):
    """Pure-JAX reference matching the PyTorch forward exactly."""
    B, L, C = x.shape
    N = seq_len // patch_len
    M = pred_len // patch_len
    W = patch_len
    d = d_model
    d2 = d // 2
    seq_last = x[:, -1:, :]
    xc = x - seq_last
    xw = jnp.transpose(xc, (0, 2, 1)).reshape(B * C, N, W)
    enc_in = jnp.maximum(xw @ params["wp"] + params["bp"], 0.0)      # [BC, N, d]

    def cell(xt, h):
        r = jax.nn.sigmoid(xt @ params["wir"] + params["bir"]
                           + h @ params["whr"] + params["bhr"])
        z = jax.nn.sigmoid(xt @ params["wiz"] + params["biz"]
                           + h @ params["whz"] + params["bhz"])
        n = jnp.tanh(xt @ params["win"] + params["bin"]
                     + r * (h @ params["whn"] + params["bhn"]))
        return (1.0 - z) * n + z * h

    h = jnp.zeros((B * C, d), jnp.float32)
    for t in range(N):
        h = cell(enc_in[:, t, :], h)

    h_rep = jnp.repeat(h, M, axis=0)                                 # [BC*M, d]
    pos_part = jnp.tile(params["pos_emb"], (B * C, 1))               # [BC*M, d/2]
    chan_part = jnp.broadcast_to(params["channel_emb"][None, :, None, :],
                                 (B, C, M, d2)).reshape(B * C * M, d2)
    dec_in = jnp.concatenate([pos_part, chan_part], axis=-1)
    h_dec = cell(dec_in, h_rep)
    yw = h_dec @ params["wre"] + params["bre"]                       # [BC*M, W]
    y = yw.reshape(B, C, M * W).transpose(0, 2, 1) + seq_last
    return y


if __name__ == "__main__":
    # Small config consistent with the module's forward.
    B, C = 2, 4
    seq_len, pred_len, patch_len, d_model = 8, 8, 4, 32
    M = pred_len // patch_len
    W = patch_len
    d = d_model
    d2 = d // 2

    key = jax.random.PRNGKey(0)
    ks = jax.random.split(key, 21)
    u = lambda k, shape, s: jax.random.uniform(k, shape, jnp.float32, -s, s)
    sp = 1.0 / math.sqrt(W)
    sg = 1.0 / math.sqrt(d)

    # Deterministic synthetic parameters (nn.Linear / nn.GRU-style shapes).
    # TODO(synk): `self.lucky` nn.Embedding is unused in forward(); not materialized.
    params = dict(
        wp=u(ks[0], (W, d), sp), bp=u(ks[1], (1, d), sp),            # linear_patch
        wir=u(ks[2], (d, d), sg), wiz=u(ks[3], (d, d), sg), win=u(ks[4], (d, d), sg),
        whr=u(ks[5], (d, d), sg), whz=u(ks[6], (d, d), sg), whn=u(ks[7], (d, d), sg),
        bir=u(ks[8], (1, d), sg), biz=u(ks[9], (1, d), sg), bin=u(ks[10], (1, d), sg),
        bhr=u(ks[11], (1, d), sg), bhz=u(ks[12], (1, d), sg), bhn=u(ks[13], (1, d), sg),
        wre=u(ks[14], (d, W), sg), bre=u(ks[15], (1, W), sg),        # linear_patch_re
        pos_emb=jax.random.normal(ks[16], (M, d2), jnp.float32),
        channel_emb=jax.random.normal(ks[17], (C, d2), jnp.float32),
    )
    x = jax.random.normal(ks[18], (B, seq_len, C), jnp.float32)

    # Note: on v6e/v7x pass mxu_dtype=jnp.bfloat16 for faster MXU / less traffic
    # (loosen the tolerance accordingly); keep f32 here for the tight check.
    y = segrnn_forward(x, params, seq_len=seq_len, pred_len=pred_len,
                       patch_len=patch_len, d_model=d_model)
    y = jax.block_until_ready(y)

    y_ref = segrnn_reference(x, params, seq_len=seq_len, pred_len=pred_len,
                             patch_len=patch_len, d_model=d_model)
    assert y.shape == (B, pred_len, C)
    np.testing.assert_allclose(np.asarray(y), np.asarray(y_ref), atol=2e-5, rtol=2e-5)
    print("KERNEL_OK")
</pallas_src>

<mosaic_0001>
module attributes {stable_mosaic.version = 11 : i64} {
  func.func @_segrnn_kernel(%arg0: i32, %arg1: memref<2x8x4xf32, #tpu.memory_space<vmem>>, %arg2: memref<2x8x32xf32, #tpu.memory_space<vmem>>, %arg3: memref<8x1xf32, #tpu.memory_space<vmem>>, %arg4: memref<4x32xf32, #tpu.memory_space<vmem>>, %arg5: memref<1x32xf32, #tpu.memory_space<vmem>>, %arg6: memref<32x96xf32, #tpu.memory_space<vmem>>, %arg7: memref<32x96xf32, #tpu.memory_space<vmem>>, %arg8: memref<1x96xf32, #tpu.memory_space<vmem>>, %arg9: memref<1x32xf32, #tpu.memory_space<vmem>>, %arg10: memref<32x4xf32, #tpu.memory_space<vmem>>, %arg11: memref<1x4xf32, #tpu.memory_space<vmem>>, %arg12: memref<8x8xf32, #tpu.memory_space<vmem>>, %arg13: memref<2x8x96xf32, #tpu.memory_space<vmem>>) attributes {dimension_semantics = [#tpu.dimension_semantics<parallel>], iteration_bounds = array<i64: 1>, scalar_prefetch = 0 : i64, scratch_operands = 1 : i64, tpu.core_type = #tpu.core_type<tc>, window_params = [{transform_indices = @transform_0, window_bounds = array<i64: 2, 8, 4>}, {transform_indices = @transform_1, window_bounds = array<i64: 2, 8, 32>}, {transform_indices = @transform_2, window_bounds = array<i64: 8, 1>}, {pipeline_mode = #tpu.pipeline_mode<synchronous>, transform_indices = @transform_3, window_bounds = array<i64: 4, 32>}, {pipeline_mode = #tpu.pipeline_mode<synchronous>, transform_indices = @transform_4, window_bounds = array<i64: 1, 32>}, {pipeline_mode = #tpu.pipeline_mode<synchronous>, transform_indices = @transform_5, window_bounds = array<i64: 32, 96>}, {pipeline_mode = #tpu.pipeline_mode<synchronous>, transform_indices = @transform_6, window_bounds = array<i64: 32, 96>}, {pipeline_mode = #tpu.pipeline_mode<synchronous>, transform_indices = @transform_7, window_bounds = array<i64: 1, 96>}, {pipeline_mode = #tpu.pipeline_mode<synchronous>, transform_indices = @transform_8, window_bounds = array<i64: 1, 32>}, {pipeline_mode = #tpu.pipeline_mode<synchronous>, transform_indices = @transform_9, window_bounds = array<i64: 32, 4>}, {pipeline_mode = #tpu.pipeline_mode<synchronous>, transform_indices = @transform_10, window_bounds = array<i64: 1, 4>}, {transform_indices = @transform_11, window_bounds = array<i64: 8, 8>}]} {
    %c0 = arith.constant 0 : index
    %c0_0 = arith.constant 0 : index
    %0 = vector.load %arg4[%c0, %c0_0] : memref<4x32xf32, #tpu.memory_space<vmem>>, vector<4x32xf32>
    %c0_1 = arith.constant 0 : index
    %c0_2 = arith.constant 0 : index
    %1 = vector.load %arg5[%c0_1, %c0_2] : memref<1x32xf32, #tpu.memory_space<vmem>>, vector<1x32xf32>
    %c0_3 = arith.constant 0 : index
    %c0_4 = arith.constant 0 : index
    %2 = vector.load %arg6[%c0_3, %c0_4] : memref<32x96xf32, #tpu.memory_space<vmem>>, vector<32x96xf32>
    %c0_5 = arith.constant 0 : index
    %c0_6 = arith.constant 0 : index
    %3 = vector.load %arg7[%c0_5, %c0_6] : memref<32x96xf32, #tpu.memory_space<vmem>>, vector<32x96xf32>
    %c0_7 = arith.constant 0 : index
    %c0_8 = arith.constant 0 : index
    %4 = vector.load %arg8[%c0_7, %c0_8] : memref<1x96xf32, #tpu.memory_space<vmem>>, vector<1x96xf32>
    %c0_9 = arith.constant 0 : index
    %c0_10 = arith.constant 0 : index
    %5 = vector.load %arg9[%c0_9, %c0_10] : memref<1x32xf32, #tpu.memory_space<vmem>>, vector<1x32xf32>
    %c0_11 = arith.constant 0 : index
    %c0_12 = arith.constant 0 : index
    %6 = vector.load %arg10[%c0_11, %c0_12] : memref<32x4xf32, #tpu.memory_space<vmem>>, vector<32x4xf32>
    %c0_13 = arith.constant 0 : index
    %c0_14 = arith.constant 0 : index
    %7 = vector.load %arg11[%c0_13, %c0_14] : memref<1x4xf32, #tpu.memory_space<vmem>>, vector<1x4xf32>
    %c0_15 = arith.constant 0 : index
    %c0_16 = arith.constant 0 : index
    %c0_17 = arith.constant 0 : index
    %8 = vector.load %arg1[%c0_15, %c0_16, %c0_17] : memref<2x8x4xf32, #tpu.memory_space<vmem>>, vector<2x8x4xf32>
    %9 = vector.shape_cast %8 : vector<2x8x4xf32> to vector<16x4xf32>
    %cst = arith.constant dense<0.000000e+00> : vector<16x32xf32>
    %10 = tpu.matmul %9, %0, %cst {dimension_numbers = #tpu.dot_dimension_numbers<[1], [0], [0], [1], [0, 0, 1, 1], [], []>} : vector<16x4xf32>, vector<4x32xf32>, vector<16x32xf32> -> vector<16x32xf32>
    %11 = vector.broadcast %1 : vector<1x32xf32> to vector<16x32xf32>
    %12 = arith.addf %10, %11 : vector<16x32xf32>
    %cst_18 = arith.constant 0.000000e+00 : f32
    %13 = vector.broadcast %cst_18 : f32 to vector<16x32xf32>
    %14 = arith.maximumf %12, %13 : vector<16x32xf32>
    %cst_19 = arith.constant dense<0.000000e+00> : vector<16x96xf32>
    %15 = tpu.matmul %14, %2, %cst_19 {dimension_numbers = #tpu.dot_dimension_numbers<[1], [0], [0], [1], [0, 0, 1, 1], [], []>} : vector<16x32xf32>, vector<32x96xf32>, vector<16x96xf32> -> vector<16x96xf32>
    %16 = vector.broadcast %4 : vector<1x96xf32> to vector<16x96xf32>
    %17 = arith.addf %15, %16 : vector<16x96xf32>
    %18 = vector.shape_cast %17 : vector<16x96xf32> to vector<2x8x96xf32>
    %c0_20 = arith.constant 0 : index
    %c0_21 = arith.constant 0 : index
    %c0_22 = arith.constant 0 : index
    %19 = vector.load %arg13[%c0_20, %c0_21, %c0_22] : memref<2x8x96xf32, #tpu.memory_space<vmem>>, vector<2x8x96xf32>
    tpu.vector_store %arg13[%c0_20, %c0_21, %c0_22], %18 {strides = array<i32>} : memref<2x8x96xf32, #tpu.memory_space<vmem>>, vector<2x8x96xf32>,
    %cst_23 = arith.constant 0.000000e+00 : f32
    %20 = vector.broadcast %cst_23 : f32 to vector<8x32xf32>
    %c0_i32 = arith.constant 0 : i32
    %cst_24 = arith.constant dense<0.000000e+00> : vector<8x96xf32>
    %21 = tpu.matmul %20, %3, %cst_24 {dimension_numbers = #tpu.dot_dimension_numbers<[1], [0], [0], [1], [0, 0, 1, 1], [], []>} : vector<8x32xf32>, vector<32x96xf32>, vector<8x96xf32> -> vector<8x96xf32>
    %22 = arith.index_cast %c0_i32 : i32 to index
    %c0_25 = arith.constant 0 : index
    %c0_26 = arith.constant 0 : index
    %23 = vector.load %arg13[%22, %c0_25, %c0_26] : memref<2x8x96xf32, #tpu.memory_space<vmem>>, vector<1x8x96xf32>
    %24 = vector.shape_cast %23 : vector<1x8x96xf32> to vector<8x96xf32>
    %25 = vector.extract_strided_slice %24 {offsets = [0, 0], sizes = [8, 32], strides = [1, 1]} : vector<8x96xf32> to vector<8x32xf32>
    %26 = vector.extract_strided_slice %21 {offsets = [0, 0], sizes = [8, 32], strides = [1, 1]} : vector<8x96xf32> to vector<8x32xf32>
    %27 = arith.addf %25, %26 : vector<8x32xf32>
    %cst_27 = arith.constant 5.000000e-01 : f32
    %28 = vector.broadcast %cst_27 : f32 to vector<8x32xf32>
    %29 = arith.mulf %28, %27 : vector<8x32xf32>
    %30 = math.tanh %29 : vector<8x32xf32>
    %cst_28 = arith.constant 1.000000e+00 : f32
    %31 = vector.broadcast %cst_28 : f32 to vector<8x32xf32>
    %32 = arith.addf %30, %31 : vector<8x32xf32>
    %cst_29 = arith.constant 5.000000e-01 : f32
    %33 = vector.broadcast %cst_29 : f32 to vector<8x32xf32>
    %34 = arith.mulf %33, %32 : vector<8x32xf32>
    %35 = vector.extract_strided_slice %24 {offsets = [0, 32], sizes = [8, 32], strides = [1, 1]} : vector<8x96xf32> to vector<8x32xf32>
    %36 = vector.extract_strided_slice %21 {offsets = [0, 32], sizes = [8, 32], strides = [1, 1]} : vector<8x96xf32> to vector<8x32xf32>
    %37 = arith.addf %35, %36 : vector<8x32xf32>
    %cst_30 = arith.constant 5.000000e-01 : f32
    %38 = vector.broadcast %cst_30 : f32 to vector<8x32xf32>
    %39 = arith.mulf %38, %37 : vector<8x32xf32>
    %40 = math.tanh %39 : vector<8x32xf32>
    %cst_31 = arith.constant 1.000000e+00 : f32
    %41 = vector.broadcast %cst_31 : f32 to vector<8x32xf32>
    %42 = arith.addf %40, %41 : vector<8x32xf32>
    %cst_32 = arith.constant 5.000000e-01 : f32
    %43 = vector.broadcast %cst_32 : f32 to vector<8x32xf32>
    %44 = arith.mulf %43, %42 : vector<8x32xf32>
    %45 = vector.extract_strided_slice %24 {offsets = [0, 64], sizes = [8, 32], strides = [1, 1]} : vector<8x96xf32> to vector<8x32xf32>
    %46 = vector.extract_strided_slice %21 {offsets = [0, 64], sizes = [8, 32], strides = [1, 1]} : vector<8x96xf32> to vector<8x32xf32>
    %47 = vector.broadcast %5 : vector<1x32xf32> to vector<8x32xf32>
    %48 = arith.addf %46, %47 : vector<8x32xf32>
    %49 = arith.mulf %34, %48 : vector<8x32xf32>
    %50 = arith.addf %45, %49 : vector<8x32xf32>
    %51 = math.tanh %50 : vector<8x32xf32>
    %cst_33 = arith.constant 1.000000e+00 : f32
    %52 = vector.broadcast %cst_33 : f32 to vector<8x32xf32>
    %53 = arith.subf %52, %44 : vector<8x32xf32>
    %54 = arith.mulf %53, %51 : vector<8x32xf32>
    %55 = arith.mulf %44, %20 : vector<8x32xf32>
    %56 = arith.addf %54, %55 : vector<8x32xf32>
    %c1_i32 = arith.constant 1 : i32
    %cst_34 = arith.constant dense<0.000000e+00> : vector<8x96xf32>
    %57 = tpu.matmul %56, %3, %cst_34 {dimension_numbers = #tpu.dot_dimension_numbers<[1], [0], [0], [1], [0, 0, 1, 1], [], []>} : vector<8x32xf32>, vector<32x96xf32>, vector<8x96xf32> -> vector<8x96xf32>
    %58 = arith.index_cast %c1_i32 : i32 to index
    %c0_35 = arith.constant 0 : index
    %c0_36 = arith.constant 0 : index
    %59 = vector.load %arg13[%58, %c0_35, %c0_36] : memref<2x8x96xf32, #tpu.memory_space<vmem>>, vector<1x8x96xf32>
    %60 = vector.shape_cast %59 : vector<1x8x96xf32> to vector<8x96xf32>
    %61 = vector.extract_strided_slice %60 {offsets = [0, 0], sizes = [8, 32], strides = [1, 1]} : vector<8x96xf32> to vector<8x32xf32>
    %62 = vector.extract_strided_slice %57 {offsets = [0, 0], sizes = [8, 32], strides = [1, 1]} : vector<8x96xf32> to vector<8x32xf32>
    %63 = arith.addf %61, %62 : vector<8x32xf32>
    %cst_37 = arith.constant 5.000000e-01 : f32
    %64 = vector.broadcast %cst_37 : f32 to vector<8x32xf32>
    %65 = arith.mulf %64, %63 : vector<8x32xf32>
    %66 = math.tanh %65 : vector<8x32xf32>
    %cst_38 = arith.constant 1.000000e+00 : f32
    %67 = vector.broadcast %cst_38 : f32 to vector<8x32xf32>
    %68 = arith.addf %66, %67 : vector<8x32xf32>
    %cst_39 = arith.constant 5.000000e-01 : f32
    %69 = vector.broadcast %cst_39 : f32 to vector<8x32xf32>
    %70 = arith.mulf %69, %68 : vector<8x32xf32>
    %71 = vector.extract_strided_slice %60 {offsets = [0, 32], sizes = [8, 32], strides = [1, 1]} : vector<8x96xf32> to vector<8x32xf32>
    %72 = vector.extract_strided_slice %57 {offsets = [0, 32], sizes = [8, 32], strides = [1, 1]} : vector<8x96xf32> to vector<8x32xf32>
    %73 = arith.addf %71, %72 : vector<8x32xf32>
    %cst_40 = arith.constant 5.000000e-01 : f32
    %74 = vector.broadcast %cst_40 : f32 to vector<8x32xf32>
    %75 = arith.mulf %74, %73 : vector<8x32xf32>
    %76 = math.tanh %75 : vector<8x32xf32>
    %cst_41 = arith.constant 1.000000e+00 : f32
    %77 = vector.broadcast %cst_41 : f32 to vector<8x32xf32>
    %78 = arith.addf %76, %77 : vector<8x32xf32>
    %cst_42 = arith.constant 5.000000e-01 : f32
    %79 = vector.broadcast %cst_42 : f32 to vector<8x32xf32>
    %80 = arith.mulf %79, %78 : vector<8x32xf32>
    %81 = vector.extract_strided_slice %60 {offsets = [0, 64], sizes = [8, 32], strides = [1, 1]} : vector<8x96xf32> to vector<8x32xf32>
    %82 = vector.extract_strided_slice %57 {offsets = [0, 64], sizes = [8, 32], strides = [1, 1]} : vector<8x96xf32> to vector<8x32xf32>
    %83 = vector.broadcast %5 : vector<1x32xf32> to vector<8x32xf32>
    %84 = arith.addf %82, %83 : vector<8x32xf32>
    %85 = arith.mulf %70, %84 : vector<8x32xf32>
    %86 = arith.addf %81, %85 : vector<8x32xf32>
    %87 = math.tanh %86 : vector<8x32xf32>
    %cst_43 = arith.constant 1.000000e+00 : f32
    %88 = vector.broadcast %cst_43 : f32 to vector<8x32xf32>
    %89 = arith.subf %88, %80 : vector<8x32xf32>
    %90 = arith.mulf %89, %87 : vector<8x32xf32>
    %91 = arith.mulf %80, %56 : vector<8x32xf32>
    %92 = arith.addf %90, %91 : vector<8x32xf32>
    %c2_i32 = arith.constant 2 : i32
    %cst_44 = arith.constant dense<0.000000e+00> : vector<8x96xf32>
    %93 = tpu.matmul %92, %3, %cst_44 {dimension_numbers = #tpu.dot_dimension_numbers<[1], [0], [0], [1], [0, 0, 1, 1], [], []>} : vector<8x32xf32>, vector<32x96xf32>, vector<8x96xf32> -> vector<8x96xf32>
    %c0_45 = arith.constant 0 : index
    %c0_46 = arith.constant 0 : index
    %c0_47 = arith.constant 0 : index
    %94 = vector.load %arg2[%c0_45, %c0_46, %c0_47] : memref<2x8x32xf32, #tpu.memory_space<vmem>>, vector<2x8x32xf32>
    %95 = vector.shape_cast %94 : vector<2x8x32xf32> to vector<16x32xf32>
    %cst_48 = arith.constant dense<0.000000e+00> : vector<16x96xf32>
    %96 = tpu.matmul %95, %2, %cst_48 {dimension_numbers = #tpu.dot_dimension_numbers<[1], [0], [0], [1], [0, 0, 1, 1], [], []>} : vector<16x32xf32>, vector<32x96xf32>, vector<16x96xf32> -> vector<16x96xf32>
    %97 = vector.broadcast %4 : vector<1x96xf32> to vector<16x96xf32>
    %98 = arith.addf %96, %97 : vector<16x96xf32>
    %99 = vector.shape_cast %98 : vector<16x96xf32> to vector<2x8x96xf32>
    %100 = vector.shape_cast %93 : vector<8x96xf32> to vector<1x8x96xf32>
    %101 = vector.shape_cast %92 : vector<8x32xf32> to vector<1x8x32xf32>
    %102 = vector.extract_strided_slice %99 {offsets = [0, 0, 0], sizes = [2, 8, 32], strides = [1, 1, 1]} : vector<2x8x96xf32> to vector<2x8x32xf32>
    %103 = vector.extract_strided_slice %100 {offsets = [0, 0, 0], sizes = [1, 8, 32], strides = [1, 1, 1]} : vector<1x8x96xf32> to vector<1x8x32xf32>
    %104 = vector.broadcast %103 : vector<1x8x32xf32> to vector<2x8x32xf32>
    %105 = arith.addf %102, %104 : vector<2x8x32xf32>
    %cst_49 = arith.constant 5.000000e-01 : f32
    %106 = vector.broadcast %cst_49 : f32 to vector<2x8x32xf32>
    %107 = arith.mulf %106, %105 : vector<2x8x32xf32>
    %108 = math.tanh %107 : vector<2x8x32xf32>
    %cst_50 = arith.constant 1.000000e+00 : f32
    %109 = vector.broadcast %cst_50 : f32 to vector<2x8x32xf32>
    %110 = arith.addf %108, %109 : vector<2x8x32xf32>
    %cst_51 = arith.constant 5.000000e-01 : f32
    %111 = vector.broadcast %cst_51 : f32 to vector<2x8x32xf32>
    %112 = arith.mulf %111, %110 : vector<2x8x32xf32>
    %113 = vector.extract_strided_slice %99 {offsets = [0, 0, 32], sizes = [2, 8, 32], strides = [1, 1, 1]} : vector<2x8x96xf32> to vector<2x8x32xf32>
    %114 = vector.extract_strided_slice %100 {offsets = [0, 0, 32], sizes = [1, 8, 32], strides = [1, 1, 1]} : vector<1x8x96xf32> to vector<1x8x32xf32>
    %115 = vector.broadcast %114 : vector<1x8x32xf32> to vector<2x8x32xf32>
    %116 = arith.addf %113, %115 : vector<2x8x32xf32>
    %cst_52 = arith.constant 5.000000e-01 : f32
    %117 = vector.broadcast %cst_52 : f32 to vector<2x8x32xf32>
    %118 = arith.mulf %117, %116 : vector<2x8x32xf32>
    %119 = math.tanh %118 : vector<2x8x32xf32>
    %cst_53 = arith.constant 1.000000e+00 : f32
    %120 = vector.broadcast %cst_53 : f32 to vector<2x8x32xf32>
    %121 = arith.addf %119, %120 : vector<2x8x32xf32>
    %cst_54 = arith.constant 5.000000e-01 : f32
    %122 = vector.broadcast %cst_54 : f32 to vector<2x8x32xf32>
    %123 = arith.mulf %122, %121 : vector<2x8x32xf32>
    %124 = vector.extract_strided_slice %99 {offsets = [0, 0, 64], sizes = [2, 8, 32], strides = [1, 1, 1]} : vector<2x8x96xf32> to vector<2x8x32xf32>
    %125 = vector.extract_strided_slice %100 {offsets = [0, 0, 64], sizes = [1, 8, 32], strides = [1, 1, 1]} : vector<1x8x96xf32> to vector<1x8x32xf32>
    %126 = vector.shape_cast %5 : vector<1x32xf32> to vector<1x1x32xf32>
    %127 = vector.broadcast %126 : vector<1x1x32xf32> to vector<1x8x32xf32>
    %128 = arith.addf %125, %127 : vector<1x8x32xf32>
    %129 = vector.broadcast %128 : vector<1x8x32xf32> to vector<2x8x32xf32>
    %130 = arith.mulf %112, %129 : vector<2x8x32xf32>
    %131 = arith.addf %124, %130 : vector<2x8x32xf32>
    %132 = math.tanh %131 : vector<2x8x32xf32>
    %cst_55 = arith.constant 1.000000e+00 : f32
    %133 = vector.broadcast %cst_55 : f32 to vector<2x8x32xf32>
    %134 = arith.subf %133, %123 : vector<2x8x32xf32>
    %135 = arith.mulf %134, %132 : vector<2x8x32xf32>
    %136 = vector.broadcast %101 : vector<1x8x32xf32> to vector<2x8x32xf32>
    %137 = arith.mulf %123, %136 : vector<2x8x32xf32>
    %138 = arith.addf %135, %137 : vector<2x8x32xf32>
    %139 = vector.extract_strided_slice %138 {offsets = [0, 0, 0], sizes = [1, 8, 32], strides = [1, 1, 1]} : vector<2x8x32xf32> to vector<1x8x32xf32>
    %140 = vector.shape_cast %139 : vector<1x8x32xf32> to vector<8x32xf32>
    %cst_56 = arith.constant dense<0.000000e+00> : vector<8x4xf32>
    %141 = tpu.matmul %140, %6, %cst_56 {dimension_numbers = #tpu.dot_dimension_numbers<[1], [0], [0], [1], [0, 0, 1, 1], [], []>} : vector<8x32xf32>, vector<32x4xf32>, vector<8x4xf32> -> vector<8x4xf32>
    %142 = vector.broadcast %7 : vector<1x4xf32> to vector<8x4xf32>
    %143 = arith.addf %141, %142 : vector<8x4xf32>
    %144 = vector.extract_strided_slice %138 {offsets = [1, 0, 0], sizes = [1, 8, 32], strides = [1, 1, 1]} : vector<2x8x32xf32> to vector<1x8x32xf32>
    %145 = vector.shape_cast %144 : vector<1x8x32xf32> to vector<8x32xf32>
    %cst_57 = arith.constant dense<0.000000e+00> : vector<8x4xf32>
    %146 = tpu.matmul %145, %6, %cst_57 {dimension_numbers = #tpu.dot_dimension_numbers<[1], [0], [0], [1], [0, 0, 1, 1], [], []>} : vector<8x32xf32>, vector<32x4xf32>, vector<8x4xf32> -> vector<8x4xf32>
    %147 = vector.broadcast %7 : vector<1x4xf32> to vector<8x4xf32>
    %148 = arith.addf %146, %147 : vector<8x4xf32>
    %149 = tpu.concatenate %143, %148 in 1 : vector<8x4xf32>, vector<8x4xf32> -> vector<8x8xf32>
    %c0_58 = arith.constant 0 : index
    %c0_59 = arith.constant 0 : index
    %150 = vector.load %arg3[%c0_58, %c0_59] : memref<8x1xf32, #tpu.memory_space<vmem>>, vector<8x1xf32>
    %151 = vector.broadcast %150 : vector<8x1xf32> to vector<8x8xf32>
    %152 = arith.addf %149, %151 : vector<8x8xf32>
    %c0_60 = arith.constant 0 : index
    %c0_61 = arith.constant 0 : index
    %153 = vector.load %arg12[%c0_60, %c0_61] : memref<8x8xf32, #tpu.memory_space<vmem>>, vector<8x8xf32>
    tpu.vector_store %arg12[%c0_60, %c0_61], %152 {strides = array<i32>} : memref<8x8xf32, #tpu.memory_space<vmem>>, vector<8x8xf32>,
    return
  }
  func.func @transform_0(%arg0: i32) -> (i32, i32, i32) {
    %c0_i32 = arith.constant 0 : i32
    %c0_i32_0 = arith.constant 0 : i32
    %c0_i32_1 = arith.constant 0 : i32
    return %c0_i32, %arg0, %c0_i32_0 : i32, i32, i32
  }
  func.func @transform_1(%arg0: i32) -> (i32, i32, i32) {
    %c0_i32 = arith.constant 0 : i32
    %c0_i32_0 = arith.constant 0 : i32
    %c0_i32_1 = arith.constant 0 : i32
    return %c0_i32, %arg0, %c0_i32_0 : i32, i32, i32
  }
  func.func @transform_2(%arg0: i32) -> (i32, i32) {
    %c0_i32 = arith.constant 0 : i32
    %c0_i32_0 = arith.constant 0 : i32
    return %arg0, %c0_i32 : i32, i32
  }
  func.func @transform_3(%arg0: i32) -> (i32, i32) {
    %c0_i32 = arith.constant 0 : i32
    %c0_i32_0 = arith.constant 0 : i32
    %c0_i32_1 = arith.constant 0 : i32
    return %c0_i32, %c0_i32_0 : i32, i32
  }
  func.func @transform_4(%arg0: i32) -> (i32, i32) {
    %c0_i32 = arith.constant 0 : i32
    %c0_i32_0 = arith.constant 0 : i32
    %c0_i32_1 = arith.constant 0 : i32
    return %c0_i32, %c0_i32_0 : i32, i32
  }
  func.func @transform_5(%arg0: i32) -> (i32, i32) {
    %c0_i32 = arith.constant 0 : i32
    %c0_i32_0 = arith.constant 0 : i32
    %c0_i32_1 = arith.constant 0 : i32
    return %c0_i32, %c0_i32_0 : i32, i32
  }
  func.func @transform_6(%arg0: i32) -> (i32, i32) {
    %c0_i32 = arith.constant 0 : i32
    %c0_i32_0 = arith.constant 0 : i32
    %c0_i32_1 = arith.constant 0 : i32
    return %c0_i32, %c0_i32_0 : i32, i32
  }
  func.func @transform_7(%arg0: i32) -> (i32, i32) {
    %c0_i32 = arith.constant 0 : i32
    %c0_i32_0 = arith.constant 0 : i32
    %c0_i32_1 = arith.constant 0 : i32
    return %c0_i32, %c0_i32_0 : i32, i32
  }
  func.func @transform_8(%arg0: i32) -> (i32, i32) {
    %c0_i32 = arith.constant 0 : i32
    %c0_i32_0 = arith.constant 0 : i32
    %c0_i32_1 = arith.constant 0 : i32
    return %c0_i32, %c0_i32_0 : i32, i32
  }
  func.func @transform_9(%arg0: i32) -> (i32, i32) {
    %c0_i32 = arith.constant 0 : i32
    %c0_i32_0 = arith.constant 0 : i32
    %c0_i32_1 = arith.constant 0 : i32
    return %c0_i32, %c0_i32_0 : i32, i32
  }
  func.func @transform_10(%arg0: i32) -> (i32, i32) {
    %c0_i32 = arith.constant 0 : i32
    %c0_i32_0 = arith.constant 0 : i32
    %c0_i32_1 = arith.constant 0 : i32
    return %c0_i32, %c0_i32_0 : i32, i32
  }
  func.func @transform_11(%arg0: i32) -> (i32, i32) {
    %c0_i32 = arith.constant 0 : i32
    %c0_i32_0 = arith.constant 0 : i32
    return %arg0, %c0_i32 : i32, i32
  }
}

</mosaic_0001>

<llo_original>
// kernel: tpu_custom_call.1
$region0: #{tpu_custom_call.1}
  #allocation0 [shape = 'u32[]', space=smem, size = 0x4, offset = 0x4, fixed_abs, tag = 'smem constant byte address 0x4 - core index']
  #allocation1 [shape = 'u32[144,128]{1,0:T(1,128)}', space=vmem, size = 0x12000, scoped, tag = 'internal scratch']
  #allocation2 [shape = 'f32[2,8,96]{2,1,0:T(8,128)}', space=vmem, size = 0x2000, scoped, tag = 'scratch operand']
  %s0 = inlined_call_operand.vmem [shape: f32[2,8,4], index: 0, kind: input, shape index: {}]
  %s1 = inlined_call_operand.hbm [shape: f32[2,8,32], index: 1, kind: input, shape index: {}]
  %s2 = inlined_call_operand.vmem [shape: f32[8,1], index: 2, kind: input, shape index: {}]
  %s3 = inlined_call_operand.vmem [shape: f32[4,32], index: 3, kind: input, shape index: {}]
  %s4 = inlined_call_operand.vmem [shape: f32[1,32], index: 4, kind: input, shape index: {}]
  %s5 = inlined_call_operand.vmem [shape: f32[32,96], index: 5, kind: input, shape index: {}]
  %s6 = inlined_call_operand.vmem [shape: f32[32,96], index: 6, kind: input, shape index: {}]
  %s7 = inlined_call_operand.vmem [shape: f32[1,96], index: 7, kind: input, shape index: {}]
  %s8 = inlined_call_operand.vmem [shape: f32[1,32], index: 8, kind: input, shape index: {}]
  %s9 = inlined_call_operand.vmem [shape: f32[32,4], index: 9, kind: input, shape index: {}]
  %s10 = inlined_call_operand.vmem [shape: f32[1,4], index: 10, kind: input, shape index: {}]
  %s11 = inlined_call_operand.hbm [shape: f32[8,8], index: 11, kind: output, shape index: {}]
  %s12 = sld [smem:[#allocation0]]
  $region58: #{tpu_custom_call.1} parent=0
    _
  %s14 = ssub.s32 1, %s12
  %s15 = scalar_select 0, %s14, %s12
  $region1: #{tpu_custom_call.1} parent=0
    #allocation3 [shape = 'u8[8192]{0}', space=vmem, size = 0x2000, scoped, tag = 'input window, operand 1, single buffered']
    #allocation4 [shape = 's32[1]{0}', space=sflag, size = 0x4, scoped, tag = 'scoped memory for tpu_custom_call.1']
    #allocation5 [shape = 's32[1]{0}', space=sflag, size = 0x4, scoped, tag = 'scoped memory for tpu_custom_call.1']
    #allocation6 [shape = 'u8[4096]{0}', space=vmem, size = 0x1000, scoped, tag = 'output window, operand 0, single buffered']
    %16 = vsyncpa [#allocation4], 0
    %17 = vsyncpa [#allocation5], 0
    // Predicated region
    $region2: #{tpu_custom_call.1} parent=1 // pred_check
      _
    $region3: #{tpu_custom_call.1} parent=1 // pred_check_branch
      %19 = sbr.rel (0) target = $region5
    $region4: #{tpu_custom_call.1} parent=1 // pred_region
      _
    $region5: #{tpu_custom_call.1} parent=1 // pred_fallthru
      _
    // Predicated region
    $region6: #{tpu_custom_call.1} parent=1 // pred_check
      _
    $region7: #{tpu_custom_call.1} parent=1 // pred_check_branch
      %21 = sbr.rel (0) target = $region9
    $region8: #{tpu_custom_call.1} parent=1 // pred_region
      %s23 = ssub.s32 256, 256
      %24 = vsyncadd [#allocation4], %s23
      %s25 = sshll.u32 [#allocation3], 4
      %s26 = int_to_ptr.vmem [resolvable:$true] %s25
      %31 = dma.hbm_to_vmem [thread:$0]  %s1, 256, %s26, [#allocation4], 128, 128, 8
    $region9: #{tpu_custom_call.1} parent=1 // pred_fallthru
      _
    // Predicated region
    $region10: #{tpu_custom_call.1} parent=1 // pred_check
      _
    $region11: #{tpu_custom_call.1} parent=1 // pred_check_branch
      %33 = sbr.rel (0) target = $region13
    $region12: #{tpu_custom_call.1} parent=1 // pred_region
      _
    $region13: #{tpu_custom_call.1} parent=1 // pred_fallthru
      _
    // Predicated region
    $region14: #{tpu_custom_call.1} parent=1 // pred_check
      _
    $region15: #{tpu_custom_call.1} parent=1 // pred_check_branch
      %35 = sbr.rel (0) target = $region17
    $region16: #{tpu_custom_call.1} parent=1 // pred_region
      _
    $region17: #{tpu_custom_call.1} parent=1 // pred_fallthru
      _
    // Predicated region
    $region18: #{tpu_custom_call.1} parent=1 // pred_check
      _
    $region19: #{tpu_custom_call.1} parent=1 // pred_check_branch
      %37 = sbr.rel (0) target = $region21
    $region20: #{tpu_custom_call.1} parent=1 // pred_region
      _
    $region21: #{tpu_custom_call.1} parent=1 // pred_fallthru
      _
    // Predicated region
    $region22: #{tpu_custom_call.1} parent=1 // pred_check
      _
    $region23: #{tpu_custom_call.1} parent=1 // pred_check_branch
      %39 = sbr.rel (0) target = $region25
    $region24: #{tpu_custom_call.1} parent=1 // pred_region
      _
    $region25: #{tpu_custom_call.1} parent=1 // pred_fallthru
      _
    // Predicated region
    $region26: #{tpu_custom_call.1} parent=1 // pred_check
      _
    $region27: #{tpu_custom_call.1} parent=1 // pred_check_branch
      %41 = sbr.rel (0) target = $region29
    $region28: #{tpu_custom_call.1} parent=1 // pred_region
      _
    $region29: #{tpu_custom_call.1} parent=1 // pred_fallthru
      _
    // Predicated region
    $region30: #{tpu_custom_call.1} parent=1 // pred_check
      _
    $region31: #{tpu_custom_call.1} parent=1 // pred_check_branch
      %43 = sbr.rel (0) target = $region33
    $region32: #{tpu_custom_call.1} parent=1 // pred_region
      _
    $region33: #{tpu_custom_call.1} parent=1 // pred_fallthru
      _
    // Predicated region
    $region34: #{tpu_custom_call.1} parent=1 // pred_check
      _
    $region35: #{tpu_custom_call.1} parent=1 // pred_check_branch
      %45 = sbr.rel (0) target = $region37
    $region36: #{tpu_custom_call.1} parent=1 // pred_region
      _
    $region37: #{tpu_custom_call.1} parent=1 // pred_fallthru
      _
    // Predicated region
    $region38: #{tpu_custom_call.1} parent=1 // pred_check
      _
    $region39: #{tpu_custom_call.1} parent=1 // pred_check_branch
      %47 = sbr.rel (0) target = $region41
    $region40: #{tpu_custom_call.1} parent=1 // pred_region
      _
    $region41: #{tpu_custom_call.1} parent=1 // pred_fallthru
      _
    // Predicated region
    $region42: #{tpu_custom_call.1} parent=1 // pred_check
      _
    $region43: #{tpu_custom_call.1} parent=1 // pred_check_branch
      %49 = sbr.rel (0) target = $region45
    $region44: #{tpu_custom_call.1} parent=1 // pred_region
      _
    $region45: #{tpu_custom_call.1} parent=1 // pred_fallthru
      _
    // Predicated region
    $region46: #{tpu_custom_call.1} parent=1 // pred_check
      _
    $region47: #{tpu_custom_call.1} parent=1 // pred_check_branch
      %51 = sbr.rel (0) target = $region49
    $region48: #{tpu_custom_call.1} parent=1 // pred_region
      %52 = dma.done [#allocation4], 256
    $region49: #{tpu_custom_call.1} parent=1 // pred_fallthru
      _
    %v53 = vld [vmem:[%s3] sm:$0xf]
    %v54 = vld [vmem:[%s4] sm:$0x1]
    %v55 = vld [vmem:[%s5] sm:$0xff]
    %v56 = vld [vmem:[%s5 + $0x8] sm:$0xff]
    %v57 = vld [vmem:[%s5 + $0x10] sm:$0xff]
    %v58 = vld [vmem:[%s5 + $0x18] sm:$0xff]
    %v59 = vld [vmem:[%s6] sm:$0xff]
    %v60 = vld [vmem:[%s6 + $0x8] sm:$0xff]
    %v61 = vld [vmem:[%s6 + $0x10] sm:$0xff]
    %v62 = vld [vmem:[%s6 + $0x18] sm:$0xff]
    %v63 = vld [vmem:[%s7] sm:$0x1]
    %v64 = vld [vmem:[%s8] sm:$0x1]
    %v65 = vld [vmem:[%s9] sm:$0xff]
    %v66 = vld [vmem:[%s9 + $0x8] sm:$0xff]
    %v67 = vld [vmem:[%s9 + $0x10] sm:$0xff]
    %v68 = vld [vmem:[%s9 + $0x18] sm:$0xff]
    %v69 = vld [vmem:[%s10] sm:$0x1]
    %v70 = vld [vmem:[%s0] sm:$0xff]
    %v71 = vld [vmem:[%s0 + $0x8] sm:$0xff]
    %v73 = vlaneseq
    %v74 = vshrl.u32 %v73, 7
    %v75 = vsub.s32 0, %v74
    %v76 = vrot.slane %v54, %v75
    %vm78 = vcmask 31744
    %v80 = vsel %vm78, %v70, 0
    %v83 = vsel %vm78, %v71, 0
    %vm85 = vcmask 1043456
    %v87 = vsel %vm85, %v53, 0
    %89 = vmatprep.subr.mxu0 0.0
    %90 = vmatpush1.msra.mxu0 0.0
    %91 = vmatprep.subr.mxu0 0.0
    %92 = vmatpush1.msra.mxu0 0.0
    %93 = vmatprep.subr.mxu0 0.0
    %94 = vmatpush1.msra.mxu0 0.0
    %95 = vmatprep.subr.mxu0 0.0
    %96 = vmatpush1.msra.mxu0 0.0
    %97 = vmatprep.subr.mxu0 0.0
    %98 = vmatpush1.msra.mxu0 0.0
    %99 = vmatprep.subr.mxu0 0.0
    %100 = vmatpush1.msra.mxu0 0.0
    %101 = vmatprep.subr.mxu0 0.0
    %102 = vmatpush1.msra.mxu0 0.0
    %103 = vmatprep.subr.mxu0 0.0
    %104 = vmatpush1.msra.mxu0 0.0
    %105 = vmatprep.subr.mxu0 0.0
    %106 = vmatpush1.msra.mxu0 0.0
    %107 = vmatprep.subr.mxu0 0.0
    %108 = vmatpush1.msra.mxu0 0.0
    %109 = vmatprep.subr.mxu0 0.0
    %110 = vmatpush1.msra.mxu0 0.0
    %111 = vmatprep.subr.mxu0 0.0
    %112 = vmatpush1.msra.mxu0 0.0
    %113 = vmatprep.subr.mxu0 0.0
    %114 = vmatpush1.msra.mxu0 0.0
    %115 = vmatprep.subr.mxu0 0.0
    %116 = vmatpush1.msra.mxu0 0.0
    %117 = vmatprep.subr.mxu0 0.0
    %118 = vmatpush1.msra.mxu0 0.0
    %119 = vmatprep.subr.mxu0 0.0
    %120 = vmatpush1.msra.mxu0 %v87
    %121 = vmatprep.subr.mxu0 0.0
    %122 = vmatpush2.msra.mxu0 0.0
    %123 = vmatprep.subr.mxu0 0.0
    %124 = vmatpush2.msra.mxu0 0.0
    %125 = vmatprep.subr.mxu0 0.0
    %126 = vmatpush2.msra.mxu0 0.0
    %127 = vmatprep.subr.mxu0 0.0
    %128 = vmatpush2.msra.mxu0 0.0
    %129 = vmatprep.subr.mxu0 0.0
    %130 = vmatpush2.msra.mxu0 0.0
    %131 = vmatprep.subr.mxu0 0.0
    %132 = vmatpush2.msra.mxu0 0.0
    %133 = vmatprep.subr.mxu0 0.0
    %134 = vmatpush2.msra.mxu0 0.0
    %135 = vmatprep.subr.mxu0 0.0
    %136 = vmatpush2.msra.mxu0 0.0
    %137 = vmatprep.subr.mxu0 0.0
    %138 = vmatpush2.msra.mxu0 0.0
    %139 = vmatprep.subr.mxu0 0.0
    %140 = vmatpush2.msra.mxu0 0.0
    %141 = vmatprep.subr.mxu0 0.0
    %142 = vmatpush2.msra.mxu0 0.0
    %143 = vmatprep.subr.mxu0 0.0
    %144 = vmatpush2.msra.mxu0 0.0
    %145 = vmatprep.subr.mxu0 0.0
    %146 = vmatpush2.msra.mxu0 0.0
    %147 = vmatprep.subr.mxu0 0.0
    %148 = vmatpush2.msra.mxu0 0.0
    %149 = vmatprep.subr.mxu0 0.0
    %150 = vmatpush2.msra.mxu0 0.0
    %151 = vmatprep.subr.mxu0 0.0
    %152 = vmatpush2.msra.mxu0 0.0
    %153 = vmatprep.mubr.f32.mxu0 0.0
    %154 = vmatmul.mubr.f32.gmra.mxu0 %v80
    %v155 = vpop.f32.mrf.mxu0
    %v156 = vadd.f32 %v76, %v155
    %v157 = vpop.f32.mrf.mxu0
    %158 = vmatprep.mubr.f32.mxu0 0.0
    %159 = vmatmul.mubr.f32.gmra.mxu0 %v83
    %v160 = vpop.f32.mrf.mxu0
    %v161 = vadd.f32 %v76, %v160
    %v162 = vpop.f32.mrf.mxu0
    %163 = vdwg.mxu0
    %v164 = vmax.f32 %v156, 0.0
    %v165 = vmax.f32 %v161, 0.0
    %v167 = vlaneseq
    %v168 = vshrl.u32 %v167, 7
    %v169 = vsub.s32 0, %v168
    %v170 = vrot.slane %v63, %v169
    %vm172 = vcmask 261120
    %v174 = vsel %vm172, %v164, 0
    %v177 = vsel %vm172, %v165, 0
    %179 = vmatprep.subr.mxu0 0.0
    %180 = vmatpush1.msra.mxu0 0.0
    %181 = vmatprep.subr.mxu0 0.0
    %182 = vmatpush1.msra.mxu0 0.0
    %183 = vmatprep.subr.mxu0 0.0
    %184 = vmatpush1.msra.mxu0 0.0
    %185 = vmatprep.subr.mxu0 0.0
    %186 = vmatpush1.msra.mxu0 0.0
    %187 = vmatprep.subr.mxu0 0.0
    %188 = vmatpush1.msra.mxu0 0.0
    %189 = vmatprep.subr.mxu0 0.0
    %190 = vmatpush1.msra.mxu0 0.0
    %191 = vmatprep.subr.mxu0 0.0
    %192 = vmatpush1.msra.mxu0 0.0
    %193 = vmatprep.subr.mxu0 0.0
    %194 = vmatpush1.msra.mxu0 0.0
    %195 = vmatprep.subr.mxu0 0.0
    %196 = vmatpush1.msra.mxu0 0.0
    %197 = vmatprep.subr.mxu0 0.0
    %198 = vmatpush1.msra.mxu0 0.0
    %199 = vmatprep.subr.mxu0 0.0
    %200 = vmatpush1.msra.mxu0 0.0
    %201 = vmatprep.subr.mxu0 0.0
    %202 = vmatpush1.msra.mxu0 0.0
    %203 = vmatprep.subr.mxu0 0.0
    %204 = vmatpush1.msra.mxu0 %v58
    %205 = vmatprep.subr.mxu0 0.0
    %206 = vmatpush1.msra.mxu0 %v57
    %207 = vmatprep.subr.mxu0 0.0
    %208 = vmatpush1.msra.mxu0 %v56
    %209 = vmatprep.subr.mxu0 0.0
    %210 = vmatpush1.msra.mxu0 %v55
    %211 = vmatprep.subr.mxu0 0.0
    %212 = vmatpush2.msra.mxu0 0.0
    %213 = vmatprep.subr.mxu0 0.0
    %214 = vmatpush2.msra.mxu0 0.0
    %215 = vmatprep.subr.mxu0 0.0
    %216 = vmatpush2.msra.mxu0 0.0
    %217 = vmatprep.subr.mxu0 0.0
    %218 = vmatpush2.msra.mxu0 0.0
    %219 = vmatprep.subr.mxu0 0.0
    %220 = vmatpush2.msra.mxu0 0.0
    %221 = vmatprep.subr.mxu0 0.0
    %222 = vmatpush2.msra.mxu0 0.0
    %223 = vmatprep.subr.mxu0 0.0
    %224 = vmatpush2.msra.mxu0 0.0
    %225 = vmatprep.subr.mxu0 0.0
    %226 = vmatpush2.msra.mxu0 0.0
    %227 = vmatprep.subr.mxu0 0.0
    %228 = vmatpush2.msra.mxu0 0.0
    %229 = vmatprep.subr.mxu0 0.0
    %230 = vmatpush2.msra.mxu0 0.0
    %231 = vmatprep.subr.mxu0 0.0
    %232 = vmatpush2.msra.mxu0 0.0
    %233 = vmatprep.subr.mxu0 0.0
    %234 = vmatpush2.msra.mxu0 0.0
    %235 = vmatprep.subr.mxu0 0.0
    %236 = vmatpush2.msra.mxu0 0.0
    %237 = vmatprep.subr.mxu0 0.0
    %238 = vmatpush2.msra.mxu0 0.0
    %239 = vmatprep.subr.mxu0 0.0
    %240 = vmatpush2.msra.mxu0 0.0
    %241 = vmatprep.subr.mxu0 0.0
    %242 = vmatpush2.msra.mxu0 0.0
    %243 = vmatprep.mubr.f32.mxu0 0.0
    %244 = vmatmul.mubr.f32.gmra.mxu0 %v174
    %v245 = vpop.f32.mrf.mxu0
    %v246 = vadd.f32 %v170, %v245
    %v247 = vpop.f32.mrf.mxu0
    %248 = vmatprep.mubr.f32.mxu0 0.0
    %249 = vmatmul.mubr.f32.gmra.mxu0 %v177
    %v250 = vpop.f32.mrf.mxu0
    %v251 = vadd.f32 %v170, %v250
    %v252 = vpop.f32.mrf.mxu0
    %253 = vdwg.mxu0
    %vm254 = vcmask 785408
    %255 = vst.msk [vmem:[#allocation2] sm:$0xff] %vm254, %v246
    %256 = vst.msk [vmem:[#allocation2 + $0x8] sm:$0xff] %vm254, %v251
    %v258 = vsel %vm172, 0.0, 0
    %260 = vmatprep.subr.mxu0 0.0
    %261 = vmatpush1.msra.mxu0 0.0
    %262 = vmatprep.subr.mxu0 0.0
    %263 = vmatpush1.msra.mxu0 0.0
    %264 = vmatprep.subr.mxu0 0.0
    %265 = vmatpush1.msra.mxu0 0.0
    %266 = vmatprep.subr.mxu0 0.0
    %267 = vmatpush1.msra.mxu0 0.0
    %268 = vmatprep.subr.mxu0 0.0
    %269 = vmatpush1.msra.mxu0 0.0
    %270 = vmatprep.subr.mxu0 0.0
    %271 = vmatpush1.msra.mxu0 0.0
    %272 = vmatprep.subr.mxu0 0.0
    %273 = vmatpush1.msra.mxu0 0.0
    %274 = vmatprep.subr.mxu0 0.0
    %275 = vmatpush1.msra.mxu0 0.0
    %276 = vmatprep.subr.mxu0 0.0
    %277 = vmatpush1.msra.mxu0 0.0
    %278 = vmatprep.subr.mxu0 0.0
    %279 = vmatpush1.msra.mxu0 0.0
    %280 = vmatprep.subr.mxu0 0.0
    %281 = vmatpush1.msra.mxu0 0.0
    %282 = vmatprep.subr.mxu0 0.0
    %283 = vmatpush1.msra.mxu0 0.0
    %284 = vmatprep.subr.mxu0 0.0
    %285 = vmatpush1.msra.mxu0 %v62
    %286 = vmatprep.subr.mxu0 0.0
    %287 = vmatpush1.msra.mxu0 %v61
    %288 = vmatprep.subr.mxu0 0.0
    %289 = vmatpush1.msra.mxu0 %v60
    %290 = vmatprep.subr.mxu0 0.0
    %291 = vmatpush1.msra.mxu0 %v59
    %292 = vmatprep.subr.mxu0 0.0
    %293 = vmatpush2.msra.mxu0 0.0
    %294 = vmatprep.subr.mxu0 0.0
    %295 = vmatpush2.msra.mxu0 0.0
    %296 = vmatprep.subr.mxu0 0.0
    %297 = vmatpush2.msra.mxu0 0.0
    %298 = vmatprep.subr.mxu0 0.0
    %299 = vmatpush2.msra.mxu0 0.0
    %300 = vmatprep.subr.mxu0 0.0
    %301 = vmatpush2.msra.mxu0 0.0
    %302 = vmatprep.subr.mxu0 0.0
    %303 = vmatpush2.msra.mxu0 0.0
    %304 = vmatprep.subr.mxu0 0.0
    %305 = vmatpush2.msra.mxu0 0.0
    %306 = vmatprep.subr.mxu0 0.0
    %307 = vmatpush2.msra.mxu0 0.0
    %308 = vmatprep.subr.mxu0 0.0
    %309 = vmatpush2.msra.mxu0 0.0
    %310 = vmatprep.subr.mxu0 0.0
    %311 = vmatpush2.msra.mxu0 0.0
    %312 = vmatprep.subr.mxu0 0.0
    %313 = vmatpush2.msra.mxu0 0.0
    %314 = vmatprep.subr.mxu0 0.0
    %315 = vmatpush2.msra.mxu0 0.0
    %316 = vmatprep.subr.mxu0 0.0
    %317 = vmatpush2.msra.mxu0 0.0
    %318 = vmatprep.subr.mxu0 0.0
    %319 = vmatpush2.msra.mxu0 0.0
    %320 = vmatprep.subr.mxu0 0.0
    %321 = vmatpush2.msra.mxu0 0.0
    %322 = vmatprep.subr.mxu0 0.0
    %323 = vmatpush2.msra.mxu0 0.0
    %324 = vmatprep.mubr.f32.mxu0 0.0
    %325 = vmatmul.mubr.f32.gmra.mxu0 %v258
    %v326 = vpop.f32.mrf.mxu0
    %v327 = vadd.f32 0.0, %v326
    %v328 = vpop.f32.mrf.mxu0
    %329 = vdwg.mxu0
    %v330 = vld [vmem:[#allocation2] sm:$0xff]
    %v331 = vadd.f32 %v330, %v327
    %v332 = vmul.f32 %v331, 0.5
    %v333 = vtanh.pop %v332
    %v334 = vadd.f32 %v333, 1.0
    %v335 = vmul.f32 %v334, 0.5
    %v337 = vlaneseq
    %v338 = vshrl.u32 %v337, 7
    %v339 = vsub.s32 0, %v338
    %v340 = vrot.slane %v64, %v339
    %341 = vrot.lane.b32.xlu0 %v340, 64
    %v342 = vpop.permute.xlu0 %341
    %v344 = vadd.f32 %v327, %v342
    %346 = vrot.lane.b32.xlu0 %v344, 64
    %v347 = vpop.permute.xlu0 %346
    %v349 = vmul.f32 %v335, %v347
    %351 = vrot.lane.b32.xlu0 %v349, 64
    %v352 = vpop.permute.xlu0 %351
    %v354 = vadd.f32 %v330, %v352
    %v355 = vtanh.pop %v354
    %v356 = vsub.f32 1.0, %v335
    %358 = vrot.lane.b32.xlu0 %v355, 96
    %v359 = vpop.permute.xlu0 %358
    %v361 = vmul.f32 %v356, %v359
    %v362 = vmul.f32 %v335, 0.0
    %v363 = vadd.f32 %v361, %v362
    %365 = vrot.lane.b32.xlu0 %v363, 96
    %v366 = vpop.permute.xlu0 %365
    %v367 = vsel %vm172, %v366, 0
    %369 = vmatprep.subr.mxu0 0.0
    %370 = vmatpush1.msra.mxu0 0.0
    %371 = vmatprep.subr.mxu0 0.0
    %372 = vmatpush1.msra.mxu0 0.0
    %373 = vmatprep.subr.mxu0 0.0
    %374 = vmatpush1.msra.mxu0 0.0
    %375 = vmatprep.subr.mxu0 0.0
    %376 = vmatpush1.msra.mxu0 0.0
    %377 = vmatprep.subr.mxu0 0.0
    %378 = vmatpush1.msra.mxu0 0.0
    %379 = vmatprep.subr.mxu0 0.0
    %380 = vmatpush1.msra.mxu0 0.0
    %381 = vmatprep.subr.mxu0 0.0
    %382 = vmatpush1.msra.mxu0 0.0
    %383 = vmatprep.subr.mxu0 0.0
    %384 = vmatpush1.msra.mxu0 0.0
    %385 = vmatprep.subr.mxu0 0.0
    %386 = vmatpush1.msra.mxu0 0.0
    %387 = vmatprep.subr.mxu0 0.0
    %388 = vmatpush1.msra.mxu0 0.0
    %389 = vmatprep.subr.mxu0 0.0
    %390 = vmatpush1.msra.mxu0 0.0
    %391 = vmatprep.subr.mxu0 0.0
    %392 = vmatpush1.msra.mxu0 0.0
    %393 = vmatprep.subr.mxu0 0.0
    %394 = vmatpush1.msra.mxu0 %v62
    %395 = vmatprep.subr.mxu0 0.0
    %396 = vmatpush1.msra.mxu0 %v61
    %397 = vmatprep.subr.mxu0 0.0
    %398 = vmatpush1.msra.mxu0 %v60
    %399 = vmatprep.subr.mxu0 0.0
    %400 = vmatpush1.msra.mxu0 %v59
    %401 = vmatprep.subr.mxu0 0.0
    %402 = vmatpush2.msra.mxu0 0.0
    %403 = vmatprep.subr.mxu0 0.0
    %404 = vmatpush2.msra.mxu0 0.0
    %405 = vmatprep.subr.mxu0 0.0
    %406 = vmatpush2.msra.mxu0 0.0
    %407 = vmatprep.subr.mxu0 0.0
    %408 = vmatpush2.msra.mxu0 0.0
    %409 = vmatprep.subr.mxu0 0.0
    %410 = vmatpush2.msra.mxu0 0.0
    %411 = vmatprep.subr.mxu0 0.0
    %412 = vmatpush2.msra.mxu0 0.0
    %413 = vmatprep.subr.mxu0 0.0
    %414 = vmatpush2.msra.mxu0 0.0
    %415 = vmatprep.subr.mxu0 0.0
    %416 = vmatpush2.msra.mxu0 0.0
    %417 = vmatprep.subr.mxu0 0.0
    %418 = vmatpush2.msra.mxu0 0.0
    %419 = vmatprep.subr.mxu0 0.0
    %420 = vmatpush2.msra.mxu0 0.0
    %421 = vmatprep.subr.mxu0 0.0
    %422 = vmatpush2.msra.mxu0 0.0
    %423 = vmatprep.subr.mxu0 0.0
    %424 = vmatpush2.msra.mxu0 0.0
    %425 = vmatprep.subr.mxu0 0.0
    %426 = vmatpush2.msra.mxu0 0.0
    %427 = vmatprep.subr.mxu0 0.0
    %428 = vmatpush2.msra.mxu0 0.0
    %429 = vmatprep.subr.mxu0 0.0
    %430 = vmatpush2.msra.mxu0 0.0
    %431 = vmatprep.subr.mxu0 0.0
    %432 = vmatpush2.msra.mxu0 0.0
    %433 = vmatprep.mubr.f32.mxu0 0.0
    %434 = vmatmul.mubr.f32.gmra.mxu0 %v367
    %v435 = vpop.f32.mrf.mxu0
    %v436 = vadd.f32 0.0, %v435
    %v437 = vpop.f32.mrf.mxu0
    %438 = vdwg.mxu0
    %s439 = scalar_lea.vmem [#allocation2], 8
    %v440 = vld [vmem:[%s439] sm:$0xff]
    %v441 = vadd.f32 %v440, %v436
    %v442 = vmul.f32 %v441, 0.5
    %v443 = vtanh.pop %v442
    %v444 = vadd.f32 %v443, 1.0
    %v445 = vmul.f32 %v444, 0.5
    %v446 = vadd.f32 %v436, %v342
    %448 = vrot.lane.b32.xlu0 %v446, 64
    %v449 = vpop.permute.xlu0 %448
    %v451 = vmul.f32 %v445, %v449
    %453 = vrot.lane.b32.xlu0 %v451, 64
    %v454 = vpop.permute.xlu0 %453
    %v456 = vadd.f32 %v440, %v454
    %v457 = vtanh.pop %v456
    %v458 = vsub.f32 1.0, %v445
    %460 = vrot.lane.b32.xlu0 %v457, 96
    %v461 = vpop.permute.xlu0 %460
    %v463 = vmul.f32 %v458, %v461
    %v464 = vmul.f32 %v445, %v363
    %v465 = vadd.f32 %v463, %v464
    %467 = vrot.lane.b32.xlu0 %v465, 96
    %v468 = vpop.permute.xlu0 %467
    %v469 = vsel %vm172, %v468, 0
    %471 = vmatprep.subr.mxu0 0.0
    %472 = vmatpush1.msra.mxu0 0.0
    %473 = vmatprep.subr.mxu0 0.0
    %474 = vmatpush1.msra.mxu0 0.0
    %475 = vmatprep.subr.mxu0 0.0
    %476 = vmatpush1.msra.mxu0 0.0
    %477 = vmatprep.subr.mxu0 0.0
    %478 = vmatpush1.msra.mxu0 0.0
    %479 = vmatprep.subr.mxu0 0.0
    %480 = vmatpush1.msra.mxu0 0.0
    %481 = vmatprep.subr.mxu0 0.0
    %482 = vmatpush1.msra.mxu0 0.0
    %483 = vmatprep.subr.mxu0 0.0
    %484 = vmatpush1.msra.mxu0 0.0
    %485 = vmatprep.subr.mxu0 0.0
    %486 = vmatpush1.msra.mxu0 0.0
    %487 = vmatprep.subr.mxu0 0.0
    %488 = vmatpush1.msra.mxu0 0.0
    %489 = vmatprep.subr.mxu0 0.0
    %490 = vmatpush1.msra.mxu0 0.0
    %491 = vmatprep.subr.mxu0 0.0
    %492 = vmatpush1.msra.mxu0 0.0
    %493 = vmatprep.subr.mxu0 0.0
    %494 = vmatpush1.msra.mxu0 0.0
    %495 = vmatprep.subr.mxu0 0.0
    %496 = vmatpush1.msra.mxu0 %v62
    %497 = vmatprep.subr.mxu0 0.0
    %498 = vmatpush1.msra.mxu0 %v61
    %499 = vmatprep.subr.mxu0 0.0
    %500 = vmatpush1.msra.mxu0 %v60
    %501 = vmatprep.subr.mxu0 0.0
    %502 = vmatpush1.msra.mxu0 %v59
    %503 = vmatprep.subr.mxu0 0.0
    %504 = vmatpush2.msra.mxu0 0.0
    %505 = vmatprep.subr.mxu0 0.0
    %506 = vmatpush2.msra.mxu0 0.0
    %507 = vmatprep.subr.mxu0 0.0
    %508 = vmatpush2.msra.mxu0 0.0
    %509 = vmatprep.subr.mxu0 0.0
    %510 = vmatpush2.msra.mxu0 0.0
    %511 = vmatprep.subr.mxu0 0.0
    %512 = vmatpush2.msra.mxu0 0.0
    %513 = vmatprep.subr.mxu0 0.0
    %514 = vmatpush2.msra.mxu0 0.0
    %515 = vmatprep.subr.mxu0 0.0
    %516 = vmatpush2.msra.mxu0 0.0
    %517 = vmatprep.subr.mxu0 0.0
    %518 = vmatpush2.msra.mxu0 0.0
    %519 = vmatprep.subr.mxu0 0.0
    %520 = vmatpush2.msra.mxu0 0.0
    %521 = vmatprep.subr.mxu0 0.0
    %522 = vmatpush2.msra.mxu0 0.0
    %523 = vmatprep.subr.mxu0 0.0
    %524 = vmatpush2.msra.mxu0 0.0
    %525 = vmatprep.subr.mxu0 0.0
    %526 = vmatpush2.msra.mxu0 0.0
    %527 = vmatprep.subr.mxu0 0.0
    %528 = vmatpush2.msra.mxu0 0.0
    %529 = vmatprep.subr.mxu0 0.0
    %530 = vmatpush2.msra.mxu0 0.0
    %531 = vmatprep.subr.mxu0 0.0
    %532 = vmatpush2.msra.mxu0 0.0
    %533 = vmatprep.subr.mxu0 0.0
    %534 = vmatpush2.msra.mxu0 0.0
    %535 = vmatprep.mubr.f32.mxu0 0.0
    %536 = vmatmul.mubr.f32.gmra.mxu0 %v469
    %v537 = vpop.f32.mrf.mxu0
    %v538 = vadd.f32 0.0, %v537
    %v539 = vpop.f32.mrf.mxu0
    %540 = vdwg.mxu0
    %v541 = vld [vmem:[#allocation3] sm:$0xff]
    %v542 = vld [vmem:[#allocation3 + $0x8] sm:$0xff]
    %v544 = vsel %vm172, %v541, 0
    %v547 = vsel %vm172, %v542, 0
    %549 = vmatprep.subr.mxu0 0.0
    %550 = vmatpush1.msra.mxu0 0.0
    %551 = vmatprep.subr.mxu0 0.0
    %552 = vmatpush1.msra.mxu0 0.0
    %553 = vmatprep.subr.mxu0 0.0
    %554 = vmatpush1.msra.mxu0 0.0
    %555 = vmatprep.subr.mxu0 0.0
    %556 = vmatpush1.msra.mxu0 0.0
    %557 = vmatprep.subr.mxu0 0.0
    %558 = vmatpush1.msra.mxu0 0.0
    %559 = vmatprep.subr.mxu0 0.0
    %560 = vmatpush1.msra.mxu0 0.0
    %561 = vmatprep.subr.mxu0 0.0
    %562 = vmatpush1.msra.mxu0 0.0
    %563 = vmatprep.subr.mxu0 0.0
    %564 = vmatpush1.msra.mxu0 0.0
    %565 = vmatprep.subr.mxu0 0.0
    %566 = vmatpush1.msra.mxu0 0.0
    %567 = vmatprep.subr.mxu0 0.0
    %568 = vmatpush1.msra.mxu0 0.0
    %569 = vmatprep.subr.mxu0 0.0
    %570 = vmatpush1.msra.mxu0 0.0
    %571 = vmatprep.subr.mxu0 0.0
    %572 = vmatpush1.msra.mxu0 0.0
    %573 = vmatprep.subr.mxu0 0.0
    %574 = vmatpush1.msra.mxu0 %v58
    %575 = vmatprep.subr.mxu0 0.0
    %576 = vmatpush1.msra.mxu0 %v57
    %577 = vmatprep.subr.mxu0 0.0
    %578 = vmatpush1.msra.mxu0 %v56
    %579 = vmatprep.subr.mxu0 0.0
    %580 = vmatpush1.msra.mxu0 %v55
    %581 = vmatprep.subr.mxu0 0.0
    %582 = vmatpush2.msra.mxu0 0.0
    %583 = vmatprep.subr.mxu0 0.0
    %584 = vmatpush2.msra.mxu0 0.0
    %585 = vmatprep.subr.mxu0 0.0
    %586 = vmatpush2.msra.mxu0 0.0
    %587 = vmatprep.subr.mxu0 0.0
    %588 = vmatpush2.msra.mxu0 0.0
    %589 = vmatprep.subr.mxu0 0.0
    %590 = vmatpush2.msra.mxu0 0.0
    %591 = vmatprep.subr.mxu0 0.0
    %592 = vmatpush2.msra.mxu0 0.0
    %593 = vmatprep.subr.mxu0 0.0
    %594 = vmatpush2.msra.mxu0 0.0
    %595 = vmatprep.subr.mxu0 0.0
    %596 = vmatpush2.msra.mxu0 0.0
    %597 = vmatprep.subr.mxu0 0.0
    %598 = vmatpush2.msra.mxu0 0.0
    %599 = vmatprep.subr.mxu0 0.0
    %600 = vmatpush2.msra.mxu0 0.0
    %601 = vmatprep.subr.mxu0 0.0
    %602 = vmatpush2.msra.mxu0 0.0
    %603 = vmatprep.subr.mxu0 0.0
    %604 = vmatpush2.msra.mxu0 0.0
    %605 = vmatprep.subr.mxu0 0.0
    %606 = vmatpush2.msra.mxu0 0.0
    %607 = vmatprep.subr.mxu0 0.0
    %608 = vmatpush2.msra.mxu0 0.0
    %609 = vmatprep.subr.mxu0 0.0
    %610 = vmatpush2.msra.mxu0 0.0
    %611 = vmatprep.subr.mxu0 0.0
    %612 = vmatpush2.msra.mxu0 0.0
    %613 = vmatprep.mubr.f32.mxu0 0.0
    %614 = vmatmul.mubr.f32.gmra.mxu0 %v544
    %v615 = vpop.f32.mrf.mxu0
    %v616 = vadd.f32 %v170, %v615
    %v617 = vpop.f32.mrf.mxu0
    %618 = vmatprep.mubr.f32.mxu0 0.0
    %619 = vmatmul.mubr.f32.gmra.mxu0 %v547
    %v620 = vpop.f32.mrf.mxu0
    %v621 = vadd.f32 %v170, %v620
    %v622 = vpop.f32.mrf.mxu0
    %623 = vdwg.mxu0
    %v624 = vadd.f32 %v616, %v538
    %v625 = vadd.f32 %v621, %v538
    %v626 = vmul.f32 %v624, 0.5
    %v627 = vmul.f32 %v625, 0.5
    %v628 = vtanh.pop %v626
    %v629 = vtanh.pop %v627
    %v630 = vadd.f32 %v628, 1.0
    %v631 = vadd.f32 %v629, 1.0
    %v632 = vmul.f32 %v630, 0.5
    %v633 = vmul.f32 %v631, 0.5
    %v634 = vadd.f32 %v538, %v342
    %636 = vrot.lane.b32.xlu0 %v634, 64
    %v637 = vpop.permute.xlu0 %636
    %v639 = vmul.f32 %v632, %v637
    %v640 = vmul.f32 %v633, %v637
    %643 = vrot.lane.b32.xlu0 %v639, 64
    %v644 = vpop.permute.xlu0 %643
    %645 = vrot.lane.b32.xlu0 %v640, 64
    %v646 = vpop.permute.xlu0 %645
    %v649 = vadd.f32 %v616, %v644
    %v650 = vadd.f32 %v621, %v646
    %v651 = vtanh.pop %v649
    %v652 = vtanh.pop %v650
    %v653 = vsub.f32 1.0, %v632
    %v654 = vsub.f32 1.0, %v633
    %657 = vrot.lane.b32.xlu0 %v651, 96
    %v658 = vpop.permute.xlu0 %657
    %659 = vrot.lane.b32.xlu0 %v652, 96
    %v660 = vpop.permute.xlu0 %659
    %v663 = vmul.f32 %v653, %v658
    %v664 = vmul.f32 %v654, %v660
    %v665 = vmul.f32 %v632, %v465
    %v666 = vmul.f32 %v633, %v465
    %v667 = vadd.f32 %v663, %v665
    %v668 = vadd.f32 %v664, %v666
    %v670 = vlaneseq
    %v671 = vshrl.u32 %v670, 7
    %v672 = vsub.s32 0, %v671
    %v673 = vrot.slane %v69, %v672
    %676 = vrot.lane.b32.xlu0 %v667, 96
    %v677 = vpop.permute.xlu0 %676
    %v678 = vsel %vm172, %v677, 0
    %680 = vmatprep.subr.mxu0 0.0
    %681 = vmatpush1.msra.mxu0 0.0
    %682 = vmatprep.subr.mxu0 0.0
    %683 = vmatpush1.msra.mxu0 0.0
    %684 = vmatprep.subr.mxu0 0.0
    %685 = vmatpush1.msra.mxu0 0.0
    %686 = vmatprep.subr.mxu0 0.0
    %687 = vmatpush1.msra.mxu0 0.0
    %688 = vmatprep.subr.mxu0 0.0
    %689 = vmatpush1.msra.mxu0 0.0
    %690 = vmatprep.subr.mxu0 0.0
    %691 = vmatpush1.msra.mxu0 0.0
    %692 = vmatprep.subr.mxu0 0.0
    %693 = vmatpush1.msra.mxu0 0.0
    %694 = vmatprep.subr.mxu0 0.0
    %695 = vmatpush1.msra.mxu0 0.0
    %696 = vmatprep.subr.mxu0 0.0
    %697 = vmatpush1.msra.mxu0 0.0
    %698 = vmatprep.subr.mxu0 0.0
    %699 = vmatpush1.msra.mxu0 0.0
    %700 = vmatprep.subr.mxu0 0.0
    %701 = vmatpush1.msra.mxu0 0.0
    %702 = vmatprep.subr.mxu0 0.0
    %703 = vmatpush1.msra.mxu0 0.0
    %704 = vmatprep.subr.mxu0 0.0
    %705 = vmatpush1.msra.mxu0 %v68
    %706 = vmatprep.subr.mxu0 0.0
    %707 = vmatpush1.msra.mxu0 %v67
    %708 = vmatprep.subr.mxu0 0.0
    %709 = vmatpush1.msra.mxu0 %v66
    %710 = vmatprep.subr.mxu0 0.0
    %711 = vmatpush1.msra.mxu0 %v65
    %712 = vmatprep.subr.mxu0 0.0
    %713 = vmatpush2.msra.mxu0 0.0
    %714 = vmatprep.subr.mxu0 0.0
    %715 = vmatpush2.msra.mxu0 0.0
    %716 = vmatprep.subr.mxu0 0.0
    %717 = vmatpush2.msra.mxu0 0.0
    %718 = vmatprep.subr.mxu0 0.0
    %719 = vmatpush2.msra.mxu0 0.0
    %720 = vmatprep.subr.mxu0 0.0
    %721 = vmatpush2.msra.mxu0 0.0
    %722 = vmatprep.subr.mxu0 0.0
    %723 = vmatpush2.msra.mxu0 0.0
    %724 = vmatprep.subr.mxu0 0.0
    %725 = vmatpush2.msra.mxu0 0.0
    %726 = vmatprep.subr.mxu0 0.0
    %727 = vmatpush2.msra.mxu0 0.0
    %728 = vmatprep.subr.mxu0 0.0
    %729 = vmatpush2.msra.mxu0 0.0
    %730 = vmatprep.subr.mxu0 0.0
    %731 = vmatpush2.msra.mxu0 0.0
    %732 = vmatprep.subr.mxu0 0.0
    %733 = vmatpush2.msra.mxu0 0.0
    %734 = vmatprep.subr.mxu0 0.0
    %735 = vmatpush2.msra.mxu0 0.0
    %736 = vmatprep.subr.mxu0 0.0
    %737 = vmatpush2.msra.mxu0 0.0
    %738 = vmatprep.subr.mxu0 0.0
    %739 = vmatpush2.msra.mxu0 0.0
    %740 = vmatprep.subr.mxu0 0.0
    %741 = vmatpush2.msra.mxu0 0.0
    %742 = vmatprep.subr.mxu0 0.0
    %743 = vmatpush2.msra.mxu0 0.0
    %744 = vmatprep.mubr.f32.mxu0 0.0
    %745 = vmatmul.mubr.f32.gmra.mxu0 %v678
    %v746 = vpop.f32.mrf.mxu0
    %v747 = vadd.f32 %v673, %v746
    %v748 = vpop.f32.mrf.mxu0
    %749 = vdwg.mxu0
    %751 = vrot.lane.b32.xlu0 %v668, 96
    %v752 = vpop.permute.xlu0 %751
    %v753 = vsel %vm172, %v752, 0
    %755 = vmatprep.subr.mxu0 0.0
    %756 = vmatpush1.msra.mxu0 0.0
    %757 = vmatprep.subr.mxu0 0.0
    %758 = vmatpush1.msra.mxu0 0.0
    %759 = vmatprep.subr.mxu0 0.0
    %760 = vmatpush1.msra.mxu0 0.0
    %761 = vmatprep.subr.mxu0 0.0
    %762 = vmatpush1.msra.mxu0 0.0
    %763 = vmatprep.subr.mxu0 0.0
    %764 = vmatpush1.msra.mxu0 0.0
    %765 = vmatprep.subr.mxu0 0.0
    %766 = vmatpush1.msra.mxu0 0.0
    %767 = vmatprep.subr.mxu0 0.0
    %768 = vmatpush1.msra.mxu0 0.0
    %769 = vmatprep.subr.mxu0 0.0
    %770 = vmatpush1.msra.mxu0 0.0
    %771 = vmatprep.subr.mxu0 0.0
    %772 = vmatpush1.msra.mxu0 0.0
    %773 = vmatprep.subr.mxu0 0.0
    %774 = vmatpush1.msra.mxu0 0.0
    %775 = vmatprep.subr.mxu0 0.0
    %776 = vmatpush1.msra.mxu0 0.0
    %777 = vmatprep.subr.mxu0 0.0
    %778 = vmatpush1.msra.mxu0 0.0
    %779 = vmatprep.subr.mxu0 0.0
    %780 = vmatpush1.msra.mxu0 %v68
    %781 = vmatprep.subr.mxu0 0.0
    %782 = vmatpush1.msra.mxu0 %v67
    %783 = vmatprep.subr.mxu0 0.0
    %784 = vmatpush1.msra.mxu0 %v66
    %785 = vmatprep.subr.mxu0 0.0
    %786 = vmatpush1.msra.mxu0 %v65
    %787 = vmatprep.subr.mxu0 0.0
    %788 = vmatpush2.msra.mxu0 0.0
    %789 = vmatprep.subr.mxu0 0.0
    %790 = vmatpush2.msra.mxu0 0.0
    %791 = vmatprep.subr.mxu0 0.0
    %792 = vmatpush2.msra.mxu0 0.0
    %793 = vmatprep.subr.mxu0 0.0
    %794 = vmatpush2.msra.mxu0 0.0
    %795 = vmatprep.subr.mxu0 0.0
    %796 = vmatpush2.msra.mxu0 0.0
    %797 = vmatprep.subr.mxu0 0.0
    %798 = vmatpush2.msra.mxu0 0.0
    %799 = vmatprep.subr.mxu0 0.0
    %800 = vmatpush2.msra.mxu0 0.0
    %801 = vmatprep.subr.mxu0 0.0
    %802 = vmatpush2.msra.mxu0 0.0
    %803 = vmatprep.subr.mxu0 0.0
    %804 = vmatpush2.msra.mxu0 0.0
    %805 = vmatprep.subr.mxu0 0.0
    %806 = vmatpush2.msra.mxu0 0.0
    %807 = vmatprep.subr.mxu0 0.0
    %808 = vmatpush2.msra.mxu0 0.0
    %809 = vmatprep.subr.mxu0 0.0
    %810 = vmatpush2.msra.mxu0 0.0
    %811 = vmatprep.subr.mxu0 0.0
    %812 = vmatpush2.msra.mxu0 0.0
    %813 = vmatprep.subr.mxu0 0.0
    %814 = vmatpush2.msra.mxu0 0.0
    %815 = vmatprep.subr.mxu0 0.0
    %816 = vmatpush2.msra.mxu0 0.0
    %817 = vmatprep.subr.mxu0 0.0
    %818 = vmatpush2.msra.mxu0 0.0
    %819 = vmatprep.mubr.f32.mxu0 0.0
    %820 = vmatmul.mubr.f32.gmra.mxu0 %v753
    %v821 = vpop.f32.mrf.mxu0
    %v822 = vadd.f32 %v673, %v821
    %v823 = vpop.f32.mrf.mxu0
    %824 = vdwg.mxu0
    %826 = vrot.lane.b32.xlu0 %v822, 4
    %v827 = vpop.permute.xlu0 %826
    %v829 = vsel %vm78, %v747, %v827
    %v830 = vld [vmem:[%s2] sm:$0xff]
    %832 = vset.pattern.permute.xlu0 0
    %833 = vperm.xlu0 %832, %v830
    %v834 = vpop.permute.xlu0 %833
    %v836 = vadd.f32 %v829, %v834
    %vm837 = vcmask 64512
    %838 = vst.msk [vmem:[#allocation6] sm:$0xff] %vm837, %v836
    // Predicated region
    $region50: #{tpu_custom_call.1} parent=1 // pred_check
      _
    $region51: #{tpu_custom_call.1} parent=1 // pred_check_branch
      %840 = sbr.rel (0) target = $region53
    $region52: #{tpu_custom_call.1} parent=1 // pred_region
      %s842 = ssub.s32 128, 128
      %843 = vsyncadd [#allocation5], %s842
      %s845 = sshll.u32 [#allocation6], 4
      %s846 = int_to_ptr.vmem [resolvable:$true] %s845
      %848 = dma.vmem_to_hbm [thread:$0]  %s846, 128, %s11, [#allocation5]
    $region53: #{tpu_custom_call.1} parent=1 // pred_fallthru
      _
    // Predicated region
    $region54: #{tpu_custom_call.1} parent=1 // pred_check
      _
    $region55: #{tpu_custom_call.1} parent=1 // pred_check_branch
      %850 = sbr.rel (0) target = $region57
    $region56: #{tpu_custom_call.1} parent=1 // pred_region
      %851 = dma.done [#allocation5], 128
    $region57: #{tpu_custom_call.1} parent=1 // pred_fallthru
      _
    %852 = vsyncpa [#allocation4], 1
    %853 = vsyncpa [#allocation5], 1

</llo_original>
